<compile_context>
chip_gen: v7x
topology: tpu7x:2x2x1
jax: 0.10.0
libtpu: 0.0.40
codegen_flags: <defaults>
</compile_context>

<pallas_src>
import functools

import jax
import jax.numpy as jnp
from jax.experimental import pallas as pl
from jax.experimental.pallas import tpu as pltpu

GEM_P = 3.0
GEM_EPS = 1e-6
_LANE = 128
_SUBLANE = 8


def cloud_model_kernel(x_ref, w1_ref, b1_ref, w2_ref, b2_ref, o_ref, acc_ref,
                       *, d_out, points_per_cloud, ragged, mm_dtype):
    """Grid = (cloud_blocks, point_chunks).  One step: cb clouds x pc points.

    x_ref : (cb, pc, c_in) f32     point-feature chunk (cast to mm_dtype here)
    w1_ref: (c_in, h_pad) mm_dtype  b1_ref: (1, h_pad) f32
    w2_ref: (h_pad, d_pad) mm_dtype b2_ref: (1, d_pad) f32
    o_ref : (1, cb, d_pad) f32     written only on the last point-chunk
    acc_ref: (cb, d_pad) f32       per-cloud running sum of fc^3 (GeM numerator)
    """
    k = pl.program_id(1)
    cb, pc, _ = x_ref.shape
    d_pad = o_ref.shape[-1]

    @pl.when(k == 0)
    def _init():
        acc_ref[...] = jnp.zeros_like(acc_ref)

    # "Backbone": per-point MLP — two MXU matmuls over the cb*pc chunk rows.
    # In-kernel bf16 cast (v6e/v7x) keeps x HBM traffic at one f32 read.
    x2 = x_ref[...].reshape(cb * pc, -1).astype(mm_dtype)
    h = jnp.dot(x2, w1_ref[...], preferred_element_type=jnp.float32)
    h = jnp.maximum(h + b1_ref[...], 0.0).astype(mm_dtype)
    f = jnp.dot(h, w2_ref[...], preferred_element_type=jnp.float32) + b2_ref[...]

    # "Head" (GeM): accumulate sum(fc^3). Cube via VPU multiplies (no EUP pow).
    fc = jnp.maximum(f, GEM_EPS)
    fc3 = (fc * fc * fc).reshape(cb, pc, d_pad)
    if ragged:
        # Last chunk may extend past the real points of a cloud; mask its rows.
        row = jax.lax.broadcasted_iota(jnp.int32, (cb, pc, d_pad), 1)
        fc3 = jnp.where(k * pc + row < points_per_cloud, fc3, 0.0)
    acc_ref[...] += jnp.sum(fc3, axis=1)

    @pl.when(k == pl.num_programs(1) - 1)
    def _finalize():
        # Cube root only on the pooled (cb, d_pad) vector.
        pooled = (acc_ref[...] * (1.0 / points_per_cloud)) ** (1.0 / GEM_P)
        # Zero padded output lanes so they do not pollute the L2 norm.
        lane = jax.lax.broadcasted_iota(jnp.int32, (cb, d_pad), 1)
        pooled = jnp.where(lane < d_out, pooled, 0.0)
        inv_norm = jax.lax.rsqrt(
            jnp.sum(pooled * pooled, axis=1, keepdims=True) + 1e-12)
        o_ref[...] = (pooled * inv_norm)[None]


def _round_up(x, m):
    return ((x + m - 1) // m) * m


def _device_config():
    """Generation-aware knobs: #TensorCores, bf16 matmul inputs, VMEM limit."""
    try:
        kind = jax.devices()[0].device_kind.lower()
    except Exception:
        kind = ""
    if "v7" in kind:
        # 64 MiB physical VMEM per TC, 2 TCs/chip, bf16 MXU.
        return {"two_cores": True, "bf16": True, "vmem_limit": 48 << 20}
    if "v6" in kind:
        return {"two_cores": False, "bf16": True, "vmem_limit": 96 << 20}
    if "v5" in kind or "v4" in kind:
        # Keep f32 matmuls (no bf16 VPU/EUP on v5e); raise the 16 MiB default.
        return {"two_cores": False, "bf16": False, "vmem_limit": 96 << 20}
    return {"two_cores": False, "bf16": False, "vmem_limit": 32 << 20}


def _pick_point_chunk(p, cb, h_pad, d_pad, vmem_limit):
    """Choose the per-step point-chunk size from a VMEM budget, not from B."""
    budget = int(vmem_limit * 0.45)
    # Per point-row live bytes (f32):
    #   x chunk: C_in lane-pads to 128 lanes, up to 3 pipeline buffers
    #   intermediates: h (h_pad) + f/fc/fc3 (~2*d_pad)
    per_row = 3 * _LANE * 4 + (h_pad + 2 * d_pad) * 4
    max_rows = max(_SUBLANE, budget // (per_row * max(cb, 1)))
    if p <= max_rows:
        return p                      # whole cloud fits in one chunk
    pc = (min(max_rows, 4096) // _SUBLANE) * _SUBLANE
    return max(min(pc, p), _SUBLANE)


def cloud_model_forward(batch, params):
    """Pallas equivalent of CloudModel.forward.

    batch: dict with
      'pointclouds_lidar_feats'  : (B*P, C_in) float32
      'pointclouds_lidar_coords' : (B*P, 4) int32 (batch idx + xyz; membership
                                                   is implied by the fixed layout)
    Returns dict with 'final_descriptor': (B, D) float32.
    """
    feats = batch["pointclouds_lidar_feats"]
    _ = batch["pointclouds_lidar_coords"]  # membership encoded by the (B, P) layout

    w1, b1, w2, b2 = params["w1"], params["b1"], params["w2"], params["b2"]
    c_in, hidden = w1.shape
    _, d_out = w2.shape
    p = int(params["points_per_cloud"])
    n_points = feats.shape[0]
    assert n_points % p == 0
    b = n_points // p

    h_pad = _round_up(hidden, _LANE)
    d_pad = _round_up(d_out, _LANE)

    cfg = _device_config()
    mm_dtype = jnp.bfloat16 if cfg["bf16"] else jnp.float32

    # Zero-pad params to lane-dense widths. Padding is mathematically inert:
    # padded hidden units have bias 0 -> relu(0)=0 -> contribute 0 downstream,
    # and padded output channels are masked out of the L2 norm in-kernel.
    w1p = jnp.zeros((c_in, h_pad), jnp.float32).at[:, :hidden].set(w1).astype(mm_dtype)
    b1p = jnp.zeros((1, h_pad), jnp.float32).at[:, :hidden].set(b1)
    w2p = jnp.zeros((h_pad, d_pad), jnp.float32).at[:hidden, :d_out].set(w2).astype(mm_dtype)
    b2p = jnp.zeros((1, d_pad), jnp.float32).at[:, :d_out].set(b2)

    # Cloud-block ("parallel") axis: split 2-way only on 2-TC chips (v7x) with
    # even B; single-TC chips keep one block (splitting is just serial overhead).
    nc = 2 if (cfg["two_cores"] and b >= 2 and b % 2 == 0) else 1
    cb = b // nc

    # Point-chunk ("arbitrary") reduction axis, sized from the VMEM budget.
    pc = _pick_point_chunk(p, cb, h_pad, d_pad, cfg["vmem_limit"])
    n_chunks = pl.cdiv(p, pc)
    ragged = (p % pc) != 0

    x = feats.astype(jnp.float32).reshape(b, p, c_in)   # f32 in HBM; cast in-kernel

    # Deeper buffering on the only streaming operand, when actually streaming.
    x_spec_kwargs = {}
    if n_chunks >= 3:
        x_spec_kwargs["pipeline_mode"] = pl.Buffered(3)
    x_spec = pl.BlockSpec((cb, pc, c_in), lambda i, k: (i, k, 0), **x_spec_kwargs)

    kernel = functools.partial(
        cloud_model_kernel, d_out=d_out, points_per_cloud=p,
        ragged=ragged, mm_dtype=mm_dtype)

    out = pl.pallas_call(
        kernel,
        out_shape=jax.ShapeDtypeStruct((nc, cb, d_pad), jnp.float32),
        grid_spec=pltpu.PrefetchScalarGridSpec(
            num_scalar_prefetch=0,
            grid=(nc, n_chunks),
            in_specs=[
                x_spec,
                pl.BlockSpec((c_in, h_pad), lambda i, k: (0, 0)),
                pl.BlockSpec((1, h_pad), lambda i, k: (0, 0)),
                pl.BlockSpec((h_pad, d_pad), lambda i, k: (0, 0)),
                pl.BlockSpec((1, d_pad), lambda i, k: (0, 0)),
            ],
            out_specs=pl.BlockSpec((1, cb, d_pad), lambda i, k: (i, 0, 0)),
            scratch_shapes=[pltpu.VMEM((cb, d_pad), jnp.float32)],
        ),
        compiler_params=pltpu.CompilerParams(
            dimension_semantics=("parallel", "arbitrary"),
            vmem_limit_bytes=cfg["vmem_limit"],
        ),
    )(x, w1p, b1p, w2p, b2p)

    return {"final_descriptor": out.reshape(b, d_pad)[:, :d_out]}


def _reference_forward(batch, params):
    """Pure-JAX f32 reference for a tolerance check."""
    feats = batch["pointclouds_lidar_feats"].astype(jnp.float32)
    w1, b1, w2, b2 = params["w1"], params["b1"], params["w2"], params["b2"]
    p = int(params["points_per_cloud"])
    b = feats.shape[0] // p
    x = feats.reshape(b, p, -1)
    h = jnp.maximum(jnp.einsum("bpc,ch->bph", x, w1) + b1, 0.0)
    f = jnp.einsum("bph,hd->bpd", h, w2) + b2
    fc = jnp.maximum(f, GEM_EPS)
    pooled = jnp.mean(fc ** GEM_P, axis=1) ** (1.0 / GEM_P)
    return pooled / jnp.linalg.norm(pooled, axis=-1, keepdims=True)


def init_params(key, c_in, hidden, d_out, points_per_cloud):
    k1, k2, k3, k4 = jax.random.split(key, 4)
    scale1 = 1.0 / jnp.sqrt(jnp.float32(c_in))
    scale2 = 1.0 / jnp.sqrt(jnp.float32(hidden))
    return {
        "w1": jax.random.normal(k1, (c_in, hidden), jnp.float32) * scale1,
        "b1": jax.random.normal(k2, (1, hidden), jnp.float32) * 0.01,
        "w2": jax.random.normal(k3, (hidden, d_out), jnp.float32) * scale2,
        "b2": jax.random.normal(k4, (1, d_out), jnp.float32) * 0.01,
        "points_per_cloud": points_per_cloud,
    }


if __name__ == "__main__":
    B = 2            # number of point clouds in the batch
    P = 128          # points per cloud
    C_IN = 4         # input point-feature channels (e.g. intensity + xyz)
    HIDDEN = 32
    D_OUT = 64       # final descriptor dimension

    key = jax.random.PRNGKey(0)
    k_feats, k_coords, k_params = jax.random.split(key, 3)

    feats = jax.random.normal(k_feats, (B * P, C_IN), jnp.float32)
    # coords: [batch_idx, x, y, z] as int32 (Minkowski-style quantized coords)
    batch_idx = jnp.repeat(jnp.arange(B, dtype=jnp.int32), P)[:, None]
    xyz = jax.random.randint(k_coords, (B * P, 3), 0, 64, dtype=jnp.int32)
    coords = jnp.concatenate([batch_idx, xyz], axis=1)

    params = init_params(k_params, C_IN, HIDDEN, D_OUT, P)

    batch = {
        "pointclouds_lidar_feats": feats,
        "pointclouds_lidar_coords": coords,
    }

    out = cloud_model_forward(batch, params)
    desc = jax.block_until_ready(out["final_descriptor"])
    assert desc.shape == (B, D_OUT)
    assert bool(jnp.all(jnp.isfinite(desc)))

    ref = _reference_forward(batch, params)
    max_err = float(jnp.max(jnp.abs(desc - ref)))
    assert max_err < 5e-2, f"max abs err vs reference too large: {max_err}"

    print("KERNEL_OK")
</pallas_src>

<mosaic_0001>
module attributes {stable_mosaic.version = 11 : i64} {
  func.func @cloud_model_kernel(%arg0: i32, %arg1: i32, %arg2: memref<2x128x4xf32, #tpu.memory_space<vmem>>, %arg3: memref<4x128xf32, #tpu.memory_space<vmem>>, %arg4: memref<1x128xf32, #tpu.memory_space<vmem>>, %arg5: memref<128x128xf32, #tpu.memory_space<vmem>>, %arg6: memref<1x128xf32, #tpu.memory_space<vmem>>, %arg7: memref<1x2x128xf32, #tpu.memory_space<vmem>>, %arg8: memref<2x128xf32, #tpu.memory_space<vmem>>) attributes {dimension_semantics = [#tpu.dimension_semantics<parallel>, #tpu.dimension_semantics<arbitrary>], iteration_bounds = array<i64: 1, 1>, scalar_prefetch = 0 : i64, scratch_operands = 1 : i64, tpu.core_type = #tpu.core_type<tc>, window_params = [{transform_indices = @transform_0, window_bounds = array<i64: 2, 128, 4>}, {pipeline_mode = #tpu.pipeline_mode<synchronous>, transform_indices = @transform_1, window_bounds = array<i64: 4, 128>}, {pipeline_mode = #tpu.pipeline_mode<synchronous>, transform_indices = @transform_2, window_bounds = array<i64: 1, 128>}, {pipeline_mode = #tpu.pipeline_mode<synchronous>, transform_indices = @transform_3, window_bounds = array<i64: 128, 128>}, {pipeline_mode = #tpu.pipeline_mode<synchronous>, transform_indices = @transform_4, window_bounds = array<i64: 1, 128>}, {transform_indices = @transform_5, window_bounds = array<i64: 1, 2, 128>}]} {
    %c0_i32 = arith.constant 0 : i32
    %0 = arith.cmpi eq, %arg1, %c0_i32 : i32
    %1 = arith.extui %0 : i1 to i32
    %c0_i32_0 = arith.constant 0 : i32
    %2 = arith.cmpi ne, %1, %c0_i32_0 : i32
    scf.if %2 {
      %cst_21 = arith.constant 0.000000e+00 : f32
      %29 = vector.broadcast %cst_21 : f32 to vector<2x128xf32>
      %c0_22 = arith.constant 0 : index
      %c0_23 = arith.constant 0 : index
      %30 = vector.load %arg8[%c0_22, %c0_23] : memref<2x128xf32, #tpu.memory_space<vmem>>, vector<2x128xf32>
      tpu.vector_store %arg8[%c0_22, %c0_23], %29 {strides = array<i32>} : memref<2x128xf32, #tpu.memory_space<vmem>>, vector<2x128xf32>,
    } else {
    }
    %c0 = arith.constant 0 : index
    %c0_1 = arith.constant 0 : index
    %c0_2 = arith.constant 0 : index
    %3 = vector.load %arg2[%c0, %c0_1, %c0_2] : memref<2x128x4xf32, #tpu.memory_space<vmem>>, vector<2x128x4xf32>
    %4 = vector.shape_cast %3 : vector<2x128x4xf32> to vector<256x4xf32>
    %c0_3 = arith.constant 0 : index
    %c0_4 = arith.constant 0 : index
    %5 = vector.load %arg3[%c0_3, %c0_4] : memref<4x128xf32, #tpu.memory_space<vmem>>, vector<4x128xf32>
    %cst = arith.constant dense<0.000000e+00> : vector<256x128xf32>
    %6 = tpu.matmul %4, %5, %cst {dimension_numbers = #tpu.dot_dimension_numbers<[1], [0], [0], [1], [0, 0, 1, 1], [], []>} : vector<256x4xf32>, vector<4x128xf32>, vector<256x128xf32> -> vector<256x128xf32>
    %c0_5 = arith.constant 0 : index
    %c0_6 = arith.constant 0 : index
    %7 = vector.load %arg4[%c0_5, %c0_6] : memref<1x128xf32, #tpu.memory_space<vmem>>, vector<1x128xf32>
    %8 = vector.broadcast %7 : vector<1x128xf32> to vector<256x128xf32>
    %9 = arith.addf %6, %8 : vector<256x128xf32>
    %cst_7 = arith.constant 0.000000e+00 : f32
    %10 = vector.broadcast %cst_7 : f32 to vector<256x128xf32>
    %11 = arith.maximumf %9, %10 : vector<256x128xf32>
    %c0_8 = arith.constant 0 : index
    %c0_9 = arith.constant 0 : index
    %12 = vector.load %arg5[%c0_8, %c0_9] : memref<128x128xf32, #tpu.memory_space<vmem>>, vector<128x128xf32>
    %cst_10 = arith.constant dense<0.000000e+00> : vector<256x128xf32>
    %13 = tpu.matmul %11, %12, %cst_10 {dimension_numbers = #tpu.dot_dimension_numbers<[1], [0], [0], [1], [0, 0, 1, 1], [], []>} : vector<256x128xf32>, vector<128x128xf32>, vector<256x128xf32> -> vector<256x128xf32>
    %c0_11 = arith.constant 0 : index
    %c0_12 = arith.constant 0 : index
    %14 = vector.load %arg6[%c0_11, %c0_12] : memref<1x128xf32, #tpu.memory_space<vmem>>, vector<1x128xf32>
    %15 = vector.broadcast %14 : vector<1x128xf32> to vector<256x128xf32>
    %16 = arith.addf %13, %15 : vector<256x128xf32>
    %cst_13 = arith.constant 9.99999997E-7 : f32
    %17 = vector.broadcast %cst_13 : f32 to vector<256x128xf32>
    %18 = arith.maximumf %16, %17 : vector<256x128xf32>
    %19 = arith.mulf %18, %18 : vector<256x128xf32>
    %20 = arith.mulf %19, %18 : vector<256x128xf32>
    %21 = vector.shape_cast %20 : vector<256x128xf32> to vector<2x128x128xf32>
    %c0_14 = arith.constant 0 : index
    %c0_15 = arith.constant 0 : index
    %22 = vector.load %arg8[%c0_14, %c0_15] : memref<2x128xf32, #tpu.memory_space<vmem>>, vector<2x128xf32>
    %cst_16 = arith.constant dense<0.000000e+00> : vector<2x128xf32>
    %23 = vector.multi_reduction <add>, %21, %cst_16 [1] : vector<2x128x128xf32> to vector<2x128xf32>
    %24 = arith.addf %22, %23 : vector<2x128xf32>
    %c0_17 = arith.constant 0 : index
    %c0_18 = arith.constant 0 : index
    %25 = vector.load %arg8[%c0_17, %c0_18] : memref<2x128xf32, #tpu.memory_space<vmem>>, vector<2x128xf32>
    tpu.vector_store %arg8[%c0_17, %c0_18], %24 {strides = array<i32>} : memref<2x128xf32, #tpu.memory_space<vmem>>, vector<2x128xf32>,
    %c0_i32_19 = arith.constant 0 : i32
    %26 = arith.cmpi eq, %arg1, %c0_i32_19 : i32
    %27 = arith.extui %26 : i1 to i32
    %c0_i32_20 = arith.constant 0 : i32
    %28 = arith.cmpi ne, %27, %c0_i32_20 : i32
    scf.if %28 {
      %c0_21 = arith.constant 0 : index
      %c0_22 = arith.constant 0 : index
      %29 = vector.load %arg8[%c0_21, %c0_22] : memref<2x128xf32, #tpu.memory_space<vmem>>, vector<2x128xf32>
      %cst_23 = arith.constant 7.812500e-03 : f32
      %30 = vector.broadcast %cst_23 : f32 to vector<2x128xf32>
      %31 = arith.mulf %29, %30 : vector<2x128xf32>
      %cst_24 = arith.constant 0.333333343 : f32
      %32 = vector.broadcast %cst_24 : f32 to vector<2x128xf32>
      %33 = math.powf %31, %32 : vector<2x128xf32>
      %34 = tpu.iota {dimensions = array<i32: 1>} : vector<2x128xi32>
      %c64_i32 = arith.constant 64 : i32
      %35 = vector.broadcast %c64_i32 : i32 to vector<2x128xi32>
      %36 = arith.cmpi slt, %34, %35 : vector<2x128xi32>
      %cst_25 = arith.constant 0.000000e+00 : f32
      %37 = vector.broadcast %cst_25 : f32 to vector<2x128xf32>
      %38 = arith.select %36, %33, %37 : vector<2x128xi1>, vector<2x128xf32>
      %39 = arith.mulf %38, %38 : vector<2x128xf32>
      %cst_26 = arith.constant dense<0.000000e+00> : vector<2xf32>
      %40 = vector.multi_reduction <add>, %39, %cst_26 [1] : vector<2x128xf32> to vector<2xf32>
      %41 = vector.shape_cast %40 : vector<2xf32> to vector<2x1xf32>
      %cst_27 = arith.constant 9.99999996E-13 : f32
      %42 = vector.broadcast %cst_27 : f32 to vector<2x1xf32>
      %43 = arith.addf %41, %42 : vector<2x1xf32>
      %44 = math.rsqrt %43 : vector<2x1xf32>
      %45 = vector.broadcast %44 : vector<2x1xf32> to vector<2x128xf32>
      %46 = arith.mulf %38, %45 : vector<2x128xf32>
      %47 = vector.shape_cast %46 : vector<2x128xf32> to vector<1x2x128xf32>
      %c0_28 = arith.constant 0 : index
      %c0_29 = arith.constant 0 : index
      %c0_30 = arith.constant 0 : index
      %48 = vector.load %arg7[%c0_28, %c0_29, %c0_30] : memref<1x2x128xf32, #tpu.memory_space<vmem>>, vector<1x2x128xf32>
      tpu.vector_store %arg7[%c0_28, %c0_29, %c0_30], %47 {strides = array<i32>} : memref<1x2x128xf32, #tpu.memory_space<vmem>>, vector<1x2x128xf32>,
    } else {
    }
    return
  }
  func.func @transform_0(%arg0: i32, %arg1: i32) -> (i32, i32, i32) {
    %c0_i32 = arith.constant 0 : i32
    %c0_i32_0 = arith.constant 0 : i32
    return %arg0, %arg1, %c0_i32 : i32, i32, i32
  }
  func.func @transform_1(%arg0: i32, %arg1: i32) -> (i32, i32) {
    %c0_i32 = arith.constant 0 : i32
    %c0_i32_0 = arith.constant 0 : i32
    %c0_i32_1 = arith.constant 0 : i32
    return %c0_i32, %c0_i32_0 : i32, i32
  }
  func.func @transform_2(%arg0: i32, %arg1: i32) -> (i32, i32) {
    %c0_i32 = arith.constant 0 : i32
    %c0_i32_0 = arith.constant 0 : i32
    %c0_i32_1 = arith.constant 0 : i32
    return %c0_i32, %c0_i32_0 : i32, i32
  }
  func.func @transform_3(%arg0: i32, %arg1: i32) -> (i32, i32) {
    %c0_i32 = arith.constant 0 : i32
    %c0_i32_0 = arith.constant 0 : i32
    %c0_i32_1 = arith.constant 0 : i32
    return %c0_i32, %c0_i32_0 : i32, i32
  }
  func.func @transform_4(%arg0: i32, %arg1: i32) -> (i32, i32) {
    %c0_i32 = arith.constant 0 : i32
    %c0_i32_0 = arith.constant 0 : i32
    %c0_i32_1 = arith.constant 0 : i32
    return %c0_i32, %c0_i32_0 : i32, i32
  }
  func.func @transform_5(%arg0: i32, %arg1: i32) -> (i32, i32, i32) {
    %c0_i32 = arith.constant 0 : i32
    %c0_i32_0 = arith.constant 0 : i32
    %c0_i32_1 = arith.constant 0 : i32
    return %arg0, %c0_i32, %c0_i32_0 : i32, i32, i32
  }
}

</mosaic_0001>

<llo_original>
// kernel: tpu_custom_call.1
$region0: #{tpu_custom_call.1}
  #allocation0 [shape = 'u32[]', space=smem, size = 0x4, offset = 0x4, fixed_abs, tag = 'smem constant byte address 0x4 - core index']
  #allocation1 [shape = 'u32[144,128]{1,0:T(1,128)}', space=vmem, size = 0x12000, scoped, tag = 'internal scratch']
  #allocation2 [shape = 'f32[2,128]{1,0:T(2,128)}', space=vmem, size = 0x400, scoped, tag = 'scratch operand']
  %s0 = inlined_call_operand.vmem [shape: f32[2,128,4], index: 0, kind: input, shape index: {}]
  %s1 = inlined_call_operand.vmem [shape: f32[4,128], index: 1, kind: input, shape index: {}]
  %s2 = inlined_call_operand.vmem [shape: f32[1,128], index: 2, kind: input, shape index: {}]
  %s3 = inlined_call_operand.vmem [shape: f32[128,128], index: 3, kind: input, shape index: {}]
  %s4 = inlined_call_operand.vmem [shape: f32[1,128], index: 4, kind: input, shape index: {}]
  %s5 = inlined_call_operand.hbm [shape: f32[1,2,128], index: 5, kind: output, shape index: {}]
  %s6 = sld [smem:[#allocation0]]
  $region38: #{tpu_custom_call.1} parent=0
    _
  %s8 = ssub.s32 1, %s6
  %s9 = scalar_select 0, %s8, %s6
  $region1: #{tpu_custom_call.1} parent=0
    #allocation3 [shape = 'u8[1024]{0}', space=vmem, size = 0x400, scoped, tag = 'output window, operand 0, single buffered']
    #allocation4 [shape = 's32[1]{0}', space=sflag, size = 0x4, scoped, tag = 'scoped memory for tpu_custom_call.1']
    %10 = vsyncpa [#allocation4], 0
    // Predicated region
    $region2: #{tpu_custom_call.1} parent=1 // pred_check
      _
    $region3: #{tpu_custom_call.1} parent=1 // pred_check_branch
      %12 = sbr.rel (0) target = $region5
    $region4: #{tpu_custom_call.1} parent=1 // pred_region
      _
    $region5: #{tpu_custom_call.1} parent=1 // pred_fallthru
      _
    // Predicated region
    $region6: #{tpu_custom_call.1} parent=1 // pred_check
      _
    $region7: #{tpu_custom_call.1} parent=1 // pred_check_branch
      %14 = sbr.rel (0) target = $region9
    $region8: #{tpu_custom_call.1} parent=1 // pred_region
      _
    $region9: #{tpu_custom_call.1} parent=1 // pred_fallthru
      _
    // Predicated region
    $region10: #{tpu_custom_call.1} parent=1 // pred_check
      _
    $region11: #{tpu_custom_call.1} parent=1 // pred_check_branch
      %16 = sbr.rel (0) target = $region13
    $region12: #{tpu_custom_call.1} parent=1 // pred_region
      _
    $region13: #{tpu_custom_call.1} parent=1 // pred_fallthru
      _
    // Predicated region
    $region14: #{tpu_custom_call.1} parent=1 // pred_check
      _
    $region15: #{tpu_custom_call.1} parent=1 // pred_check_branch
      %18 = sbr.rel (0) target = $region17
    $region16: #{tpu_custom_call.1} parent=1 // pred_region
      _
    $region17: #{tpu_custom_call.1} parent=1 // pred_fallthru
      _
    // Predicated region
    $region18: #{tpu_custom_call.1} parent=1 // pred_check
      _
    $region19: #{tpu_custom_call.1} parent=1 // pred_check_branch
      %20 = sbr.rel (0) target = $region21
    $region20: #{tpu_custom_call.1} parent=1 // pred_region
      _
    $region21: #{tpu_custom_call.1} parent=1 // pred_fallthru
      _
    %p21 = scmp.eq.s32.totalorder 0, 0
    // Predicated region
    $region22: #{tpu_custom_call.1} parent=1 // pred_check
      %p22 = pneg %p21
    $region23: #{tpu_custom_call.1} parent=1 // pred_check_branch
      %24 = sbr.rel (%p22) target = $region25
    $region24: #{tpu_custom_call.1} parent=1 // pred_region
      %25 = vst [vmem:[#allocation2] sm:$0x3] 0.0
    $region25: #{tpu_custom_call.1} parent=1 // pred_fallthru
      _
    %v26 = vld [vmem:[%s0] sm:$0xff]
    %v27 = vld [vmem:[%s0 + $0x8] sm:$0xff]
    %v28 = vld [vmem:[%s0 + $0x10] sm:$0xff]
    %v29 = vld [vmem:[%s0 + $0x18] sm:$0xff]
    %v30 = vld [vmem:[%s0 + $0x20] sm:$0xff]
    %v31 = vld [vmem:[%s0 + $0x28] sm:$0xff]
    %v32 = vld [vmem:[%s0 + $0x30] sm:$0xff]
    %v33 = vld [vmem:[%s0 + $0x38] sm:$0xff]
    %v34 = vld [vmem:[%s0 + $0x40] sm:$0xff]
    %v35 = vld [vmem:[%s0 + $0x48] sm:$0xff]
    %v36 = vld [vmem:[%s0 + $0x50] sm:$0xff]
    %v37 = vld [vmem:[%s0 + $0x58] sm:$0xff]
    %v38 = vld [vmem:[%s0 + $0x60] sm:$0xff]
    %v39 = vld [vmem:[%s0 + $0x68] sm:$0xff]
    %v40 = vld [vmem:[%s0 + $0x70] sm:$0xff]
    %v41 = vld [vmem:[%s0 + $0x78] sm:$0xff]
    %v42 = vld [vmem:[%s0 + $0x80] sm:$0xff]
    %v43 = vld [vmem:[%s0 + $0x88] sm:$0xff]
    %v44 = vld [vmem:[%s0 + $0x90] sm:$0xff]
    %v45 = vld [vmem:[%s0 + $0x98] sm:$0xff]
    %v46 = vld [vmem:[%s0 + $0xa0] sm:$0xff]
    %v47 = vld [vmem:[%s0 + $0xa8] sm:$0xff]
    %v48 = vld [vmem:[%s0 + $0xb0] sm:$0xff]
    %v49 = vld [vmem:[%s0 + $0xb8] sm:$0xff]
    %v50 = vld [vmem:[%s0 + $0xc0] sm:$0xff]
    %v51 = vld [vmem:[%s0 + $0xc8] sm:$0xff]
    %v52 = vld [vmem:[%s0 + $0xd0] sm:$0xff]
    %v53 = vld [vmem:[%s0 + $0xd8] sm:$0xff]
    %v54 = vld [vmem:[%s0 + $0xe0] sm:$0xff]
    %v55 = vld [vmem:[%s0 + $0xe8] sm:$0xff]
    %v56 = vld [vmem:[%s0 + $0xf0] sm:$0xff]
    %v57 = vld [vmem:[%s0 + $0xf8] sm:$0xff]
    %v58 = vld [vmem:[%s1] sm:$0xf]
    %v59 = vld [vmem:[%s2] sm:$0x1]
    %v61 = vlaneseq
    %v62 = vshrl.u32 %v61, 7
    %v63 = vsub.s32 0, %v62
    %v64 = vrot.slane %v59, %v63
    %vm66 = vcmask 31744
    %v68 = vsel %vm66, %v26, 0
    %v71 = vsel %vm66, %v27, 0
    %v74 = vsel %vm66, %v28, 0
    %v77 = vsel %vm66, %v29, 0
    %v80 = vsel %vm66, %v30, 0
    %v83 = vsel %vm66, %v31, 0
    %v86 = vsel %vm66, %v32, 0
    %v89 = vsel %vm66, %v33, 0
    %v92 = vsel %vm66, %v34, 0
    %v95 = vsel %vm66, %v35, 0
    %v98 = vsel %vm66, %v36, 0
    %v101 = vsel %vm66, %v37, 0
    %v104 = vsel %vm66, %v38, 0
    %v107 = vsel %vm66, %v39, 0
    %v110 = vsel %vm66, %v40, 0
    %v113 = vsel %vm66, %v41, 0
    %v116 = vsel %vm66, %v42, 0
    %v119 = vsel %vm66, %v43, 0
    %v122 = vsel %vm66, %v44, 0
    %v125 = vsel %vm66, %v45, 0
    %v128 = vsel %vm66, %v46, 0
    %v131 = vsel %vm66, %v47, 0
    %v134 = vsel %vm66, %v48, 0
    %v137 = vsel %vm66, %v49, 0
    %v140 = vsel %vm66, %v50, 0
    %v143 = vsel %vm66, %v51, 0
    %v146 = vsel %vm66, %v52, 0
    %v149 = vsel %vm66, %v53, 0
    %v152 = vsel %vm66, %v54, 0
    %v155 = vsel %vm66, %v55, 0
    %v158 = vsel %vm66, %v56, 0
    %v161 = vsel %vm66, %v57, 0
    %vm163 = vcmask 1043456
    %v165 = vsel %vm163, %v58, 0
    %167 = vmatprep.subr.mxu0 0.0
    %168 = vmatpush1.msra.mxu0 %v165
    %169 = vmatprep.subr.mxu0 0.0
    %170 = vmatpush1.msra.mxu0 0.0
    %171 = vmatprep.subr.mxu0 0.0
    %172 = vmatpush1.msra.mxu0 0.0
    %173 = vmatprep.subr.mxu0 0.0
    %174 = vmatpush1.msra.mxu0 0.0
    %175 = vmatprep.subr.mxu0 0.0
    %176 = vmatpush1.msra.mxu0 0.0
    %177 = vmatprep.subr.mxu0 0.0
    %178 = vmatpush1.msra.mxu0 0.0
    %179 = vmatprep.subr.mxu0 0.0
    %180 = vmatpush1.msra.mxu0 0.0
    %181 = vmatprep.subr.mxu0 0.0
    %182 = vmatpush1.msra.mxu0 0.0
    %183 = vmatprep.subr.mxu0 0.0
    %184 = vmatpush1.msra.mxu0 0.0
    %185 = vmatprep.subr.mxu0 0.0
    %186 = vmatpush1.msra.mxu0 0.0
    %187 = vmatprep.subr.mxu0 0.0
    %188 = vmatpush1.msra.mxu0 0.0
    %189 = vmatprep.subr.mxu0 0.0
    %190 = vmatpush1.msra.mxu0 0.0
    %191 = vmatprep.subr.mxu0 0.0
    %192 = vmatpush1.msra.mxu0 0.0
    %193 = vmatprep.subr.mxu0 0.0
    %194 = vmatpush1.msra.mxu0 0.0
    %195 = vmatprep.subr.mxu0 0.0
    %196 = vmatpush1.msra.mxu0 0.0
    %197 = vmatprep.subr.mxu0 0.0
    %198 = vmatpush1.msra.mxu0 0.0
    %199 = vmatprep.subr.mxu0 0.0
    %200 = vmatpush1.msra.mxu0 0.0
    %201 = vmatprep.subr.mxu0 0.0
    %202 = vmatpush1.msra.mxu0 0.0
    %203 = vmatprep.subr.mxu0 0.0
    %204 = vmatpush1.msra.mxu0 0.0
    %205 = vmatprep.subr.mxu0 0.0
    %206 = vmatpush1.msra.mxu0 0.0
    %207 = vmatprep.subr.mxu0 0.0
    %208 = vmatpush1.msra.mxu0 0.0
    %209 = vmatprep.subr.mxu0 0.0
    %210 = vmatpush1.msra.mxu0 0.0
    %211 = vmatprep.subr.mxu0 0.0
    %212 = vmatpush1.msra.mxu0 0.0
    %213 = vmatprep.subr.mxu0 0.0
    %214 = vmatpush1.msra.mxu0 0.0
    %215 = vmatprep.subr.mxu0 0.0
    %216 = vmatpush1.msra.mxu0 0.0
    %217 = vmatprep.subr.mxu0 0.0
    %218 = vmatpush1.msra.mxu0 0.0
    %219 = vmatprep.subr.mxu0 0.0
    %220 = vmatpush1.msra.mxu0 0.0
    %221 = vmatprep.subr.mxu0 0.0
    %222 = vmatpush1.msra.mxu0 0.0
    %223 = vmatprep.subr.mxu0 0.0
    %224 = vmatpush1.msra.mxu0 0.0
    %225 = vmatprep.subr.mxu0 0.0
    %226 = vmatpush1.msra.mxu0 0.0
    %227 = vmatprep.subr.mxu0 0.0
    %228 = vmatpush1.msra.mxu0 0.0
    %229 = vmatprep.subr.mxu0 0.0
    %230 = vmatpush1.msra.mxu0 0.0
    %231 = vmatprep.mubr.f32.mxu0 0.0
    %232 = vmatmul.mubr.f32.gmra.mrb[0].mxu0 %v68
    %v233 = vpop.f32.mrb[0].mxu0
    %v234 = vadd.f32 %v64, %v233
    %v235 = vpop.f32.mrb[0].mxu0
    %236 = vmatprep.mubr.f32.mxu0 0.0
    %237 = vmatmul.mubr.f32.gmra.mrb[0].mxu0 %v71
    %v238 = vpop.f32.mrb[0].mxu0
    %v239 = vadd.f32 %v64, %v238
    %v240 = vpop.f32.mrb[0].mxu0
    %241 = vmatprep.mubr.f32.mxu0 0.0
    %242 = vmatmul.mubr.f32.gmra.mrb[0].mxu0 %v74
    %v243 = vpop.f32.mrb[0].mxu0
    %v244 = vadd.f32 %v64, %v243
    %v245 = vpop.f32.mrb[0].mxu0
    %246 = vmatprep.mubr.f32.mxu0 0.0
    %247 = vmatmul.mubr.f32.gmra.mrb[0].mxu0 %v77
    %v248 = vpop.f32.mrb[0].mxu0
    %v249 = vadd.f32 %v64, %v248
    %v250 = vpop.f32.mrb[0].mxu0
    %251 = vmatprep.mubr.f32.mxu0 0.0
    %252 = vmatmul.mubr.f32.gmra.mrb[0].mxu0 %v80
    %v253 = vpop.f32.mrb[0].mxu0
    %v254 = vadd.f32 %v64, %v253
    %v255 = vpop.f32.mrb[0].mxu0
    %256 = vmatprep.mubr.f32.mxu0 0.0
    %257 = vmatmul.mubr.f32.gmra.mrb[0].mxu0 %v83
    %v258 = vpop.f32.mrb[0].mxu0
    %v259 = vadd.f32 %v64, %v258
    %v260 = vpop.f32.mrb[0].mxu0
    %261 = vmatprep.mubr.f32.mxu0 0.0
    %262 = vmatmul.mubr.f32.gmra.mrb[0].mxu0 %v86
    %v263 = vpop.f32.mrb[0].mxu0
    %v264 = vadd.f32 %v64, %v263
    %v265 = vpop.f32.mrb[0].mxu0
    %266 = vmatprep.mubr.f32.mxu0 0.0
    %267 = vmatmul.mubr.f32.gmra.mrb[0].mxu0 %v89
    %v268 = vpop.f32.mrb[0].mxu0
    %v269 = vadd.f32 %v64, %v268
    %v270 = vpop.f32.mrb[0].mxu0
    %271 = vmatprep.mubr.f32.mxu0 0.0
    %272 = vmatmul.mubr.f32.gmra.mrb[0].mxu0 %v92
    %v273 = vpop.f32.mrb[0].mxu0
    %v274 = vadd.f32 %v64, %v273
    %v275 = vpop.f32.mrb[0].mxu0
    %276 = vmatprep.mubr.f32.mxu0 0.0
    %277 = vmatmul.mubr.f32.gmra.mrb[0].mxu0 %v95
    %v278 = vpop.f32.mrb[0].mxu0
    %v279 = vadd.f32 %v64, %v278
    %v280 = vpop.f32.mrb[0].mxu0
    %281 = vmatprep.mubr.f32.mxu0 0.0
    %282 = vmatmul.mubr.f32.gmra.mrb[0].mxu0 %v98
    %v283 = vpop.f32.mrb[0].mxu0
    %v284 = vadd.f32 %v64, %v283
    %v285 = vpop.f32.mrb[0].mxu0
    %286 = vmatprep.mubr.f32.mxu0 0.0
    %287 = vmatmul.mubr.f32.gmra.mrb[0].mxu0 %v101
    %v288 = vpop.f32.mrb[0].mxu0
    %v289 = vadd.f32 %v64, %v288
    %v290 = vpop.f32.mrb[0].mxu0
    %291 = vmatprep.mubr.f32.mxu0 0.0
    %292 = vmatmul.mubr.f32.gmra.mrb[0].mxu0 %v104
    %v293 = vpop.f32.mrb[0].mxu0
    %v294 = vadd.f32 %v64, %v293
    %v295 = vpop.f32.mrb[0].mxu0
    %296 = vmatprep.mubr.f32.mxu0 0.0
    %297 = vmatmul.mubr.f32.gmra.mrb[0].mxu0 %v107
    %v298 = vpop.f32.mrb[0].mxu0
    %v299 = vadd.f32 %v64, %v298
    %v300 = vpop.f32.mrb[0].mxu0
    %301 = vmatprep.mubr.f32.mxu0 0.0
    %302 = vmatmul.mubr.f32.gmra.mrb[0].mxu0 %v110
    %v303 = vpop.f32.mrb[0].mxu0
    %v304 = vadd.f32 %v64, %v303
    %v305 = vpop.f32.mrb[0].mxu0
    %306 = vmatprep.mubr.f32.mxu0 0.0
    %307 = vmatmul.mubr.f32.gmra.mrb[0].mxu0 %v113
    %v308 = vpop.f32.mrb[0].mxu0
    %v309 = vadd.f32 %v64, %v308
    %v310 = vpop.f32.mrb[0].mxu0
    %311 = vmatprep.mubr.f32.mxu0 0.0
    %312 = vmatmul.mubr.f32.gmra.mrb[0].mxu0 %v116
    %v313 = vpop.f32.mrb[0].mxu0
    %v314 = vadd.f32 %v64, %v313
    %v315 = vpop.f32.mrb[0].mxu0
    %316 = vmatprep.mubr.f32.mxu0 0.0
    %317 = vmatmul.mubr.f32.gmra.mrb[0].mxu0 %v119
    %v318 = vpop.f32.mrb[0].mxu0
    %v319 = vadd.f32 %v64, %v318
    %v320 = vpop.f32.mrb[0].mxu0
    %321 = vmatprep.mubr.f32.mxu0 0.0
    %322 = vmatmul.mubr.f32.gmra.mrb[0].mxu0 %v122
    %v323 = vpop.f32.mrb[0].mxu0
    %v324 = vadd.f32 %v64, %v323
    %v325 = vpop.f32.mrb[0].mxu0
    %326 = vmatprep.mubr.f32.mxu0 0.0
    %327 = vmatmul.mubr.f32.gmra.mrb[0].mxu0 %v125
    %v328 = vpop.f32.mrb[0].mxu0
    %v329 = vadd.f32 %v64, %v328
    %v330 = vpop.f32.mrb[0].mxu0
    %331 = vmatprep.mubr.f32.mxu0 0.0
    %332 = vmatmul.mubr.f32.gmra.mrb[0].mxu0 %v128
    %v333 = vpop.f32.mrb[0].mxu0
    %v334 = vadd.f32 %v64, %v333
    %v335 = vpop.f32.mrb[0].mxu0
    %336 = vmatprep.mubr.f32.mxu0 0.0
    %337 = vmatmul.mubr.f32.gmra.mrb[0].mxu0 %v131
    %v338 = vpop.f32.mrb[0].mxu0
    %v339 = vadd.f32 %v64, %v338
    %v340 = vpop.f32.mrb[0].mxu0
    %341 = vmatprep.mubr.f32.mxu0 0.0
    %342 = vmatmul.mubr.f32.gmra.mrb[0].mxu0 %v134
    %v343 = vpop.f32.mrb[0].mxu0
    %v344 = vadd.f32 %v64, %v343
    %v345 = vpop.f32.mrb[0].mxu0
    %346 = vmatprep.mubr.f32.mxu0 0.0
    %347 = vmatmul.mubr.f32.gmra.mrb[0].mxu0 %v137
    %v348 = vpop.f32.mrb[0].mxu0
    %v349 = vadd.f32 %v64, %v348
    %v350 = vpop.f32.mrb[0].mxu0
    %351 = vmatprep.mubr.f32.mxu0 0.0
    %352 = vmatmul.mubr.f32.gmra.mrb[0].mxu0 %v140
    %v353 = vpop.f32.mrb[0].mxu0
    %v354 = vadd.f32 %v64, %v353
    %v355 = vpop.f32.mrb[0].mxu0
    %356 = vmatprep.mubr.f32.mxu0 0.0
    %357 = vmatmul.mubr.f32.gmra.mrb[0].mxu0 %v143
    %v358 = vpop.f32.mrb[0].mxu0
    %v359 = vadd.f32 %v64, %v358
    %v360 = vpop.f32.mrb[0].mxu0
    %361 = vmatprep.mubr.f32.mxu0 0.0
    %362 = vmatmul.mubr.f32.gmra.mrb[0].mxu0 %v146
    %v363 = vpop.f32.mrb[0].mxu0
    %v364 = vadd.f32 %v64, %v363
    %v365 = vpop.f32.mrb[0].mxu0
    %366 = vmatprep.mubr.f32.mxu0 0.0
    %367 = vmatmul.mubr.f32.gmra.mrb[0].mxu0 %v149
    %v368 = vpop.f32.mrb[0].mxu0
    %v369 = vadd.f32 %v64, %v368
    %v370 = vpop.f32.mrb[0].mxu0
    %371 = vmatprep.mubr.f32.mxu0 0.0
    %372 = vmatmul.mubr.f32.gmra.mrb[0].mxu0 %v152
    %v373 = vpop.f32.mrb[0].mxu0
    %v374 = vadd.f32 %v64, %v373
    %v375 = vpop.f32.mrb[0].mxu0
    %376 = vmatprep.mubr.f32.mxu0 0.0
    %377 = vmatmul.mubr.f32.gmra.mrb[0].mxu0 %v155
    %v378 = vpop.f32.mrb[0].mxu0
    %v379 = vadd.f32 %v64, %v378
    %v380 = vpop.f32.mrb[0].mxu0
    %381 = vmatprep.mubr.f32.mxu0 0.0
    %382 = vmatmul.mubr.f32.gmra.mrb[0].mxu0 %v158
    %v383 = vpop.f32.mrb[0].mxu0
    %v384 = vadd.f32 %v64, %v383
    %v385 = vpop.f32.mrb[0].mxu0
    %386 = vmatprep.mubr.f32.mxu0 0.0
    %387 = vmatmul.mubr.f32.gmra.mrb[0].mxu0 %v161
    %v388 = vpop.f32.mrb[0].mxu0
    %v389 = vadd.f32 %v64, %v388
    %v390 = vpop.f32.mrb[0].mxu0
    %391 = vdwg.mxu0
    %v392 = vmax.f32 %v234, 0.0
    %v393 = vmax.f32 %v239, 0.0
    %v394 = vmax.f32 %v244, 0.0
    %v395 = vmax.f32 %v249, 0.0
    %v396 = vmax.f32 %v254, 0.0
    %v397 = vmax.f32 %v259, 0.0
    %v398 = vmax.f32 %v264, 0.0
    %v399 = vmax.f32 %v269, 0.0
    %v400 = vmax.f32 %v274, 0.0
    %v401 = vmax.f32 %v279, 0.0
    %v402 = vmax.f32 %v284, 0.0
    %v403 = vmax.f32 %v289, 0.0
    %v404 = vmax.f32 %v294, 0.0
    %v405 = vmax.f32 %v299, 0.0
    %v406 = vmax.f32 %v304, 0.0
    %v407 = vmax.f32 %v309, 0.0
    %v408 = vmax.f32 %v314, 0.0
    %v409 = vmax.f32 %v319, 0.0
    %v410 = vmax.f32 %v324, 0.0
    %v411 = vmax.f32 %v329, 0.0
    %v412 = vmax.f32 %v334, 0.0
    %v413 = vmax.f32 %v339, 0.0
    %v414 = vmax.f32 %v344, 0.0
    %v415 = vmax.f32 %v349, 0.0
    %v416 = vmax.f32 %v354, 0.0
    %v417 = vmax.f32 %v359, 0.0
    %v418 = vmax.f32 %v364, 0.0
    %v419 = vmax.f32 %v369, 0.0
    %v420 = vmax.f32 %v374, 0.0
    %v421 = vmax.f32 %v379, 0.0
    %v422 = vmax.f32 %v384, 0.0
    %v423 = vmax.f32 %v389, 0.0
    %v424 = vld [vmem:[%s3] sm:$0xff]
    %v425 = vld [vmem:[%s3 + $0x8] sm:$0xff]
    %v426 = vld [vmem:[%s3 + $0x10] sm:$0xff]
    %v427 = vld [vmem:[%s3 + $0x18] sm:$0xff]
    %v428 = vld [vmem:[%s3 + $0x20] sm:$0xff]
    %v429 = vld [vmem:[%s3 + $0x28] sm:$0xff]
    %v430 = vld [vmem:[%s3 + $0x30] sm:$0xff]
    %v431 = vld [vmem:[%s3 + $0x38] sm:$0xff]
    %v432 = vld [vmem:[%s3 + $0x40] sm:$0xff]
    %v433 = vld [vmem:[%s3 + $0x48] sm:$0xff]
    %v434 = vld [vmem:[%s3 + $0x50] sm:$0xff]
    %v435 = vld [vmem:[%s3 + $0x58] sm:$0xff]
    %v436 = vld [vmem:[%s3 + $0x60] sm:$0xff]
    %v437 = vld [vmem:[%s3 + $0x68] sm:$0xff]
    %v438 = vld [vmem:[%s3 + $0x70] sm:$0xff]
    %v439 = vld [vmem:[%s3 + $0x78] sm:$0xff]
    %v440 = vld [vmem:[%s4] sm:$0x1]
    %v442 = vlaneseq
    %v443 = vshrl.u32 %v442, 7
    %v444 = vsub.s32 0, %v443
    %v445 = vrot.slane %v440, %v444
    %447 = vmatprep.subr.mxu0 0.0
    %448 = vmatpush1.msra.mxu0 %v424
    %449 = vmatprep.subr.mxu0 0.0
    %450 = vmatpush1.msra.mxu0 %v425
    %451 = vmatprep.subr.mxu0 0.0
    %452 = vmatpush1.msra.mxu0 %v426
    %453 = vmatprep.subr.mxu0 0.0
    %454 = vmatpush1.msra.mxu0 %v427
    %455 = vmatprep.subr.mxu0 0.0
    %456 = vmatpush1.msra.mxu0 %v428
    %457 = vmatprep.subr.mxu0 0.0
    %458 = vmatpush1.msra.mxu0 %v429
    %459 = vmatprep.subr.mxu0 0.0
    %460 = vmatpush1.msra.mxu0 %v430
    %461 = vmatprep.subr.mxu0 0.0
    %462 = vmatpush1.msra.mxu0 %v431
    %463 = vmatprep.subr.mxu0 0.0
    %464 = vmatpush1.msra.mxu0 %v432
    %465 = vmatprep.subr.mxu0 0.0
    %466 = vmatpush1.msra.mxu0 %v433
    %467 = vmatprep.subr.mxu0 0.0
    %468 = vmatpush1.msra.mxu0 %v434
    %469 = vmatprep.subr.mxu0 0.0
    %470 = vmatpush1.msra.mxu0 %v435
    %471 = vmatprep.subr.mxu0 0.0
    %472 = vmatpush1.msra.mxu0 %v436
    %473 = vmatprep.subr.mxu0 0.0
    %474 = vmatpush1.msra.mxu0 %v437
    %475 = vmatprep.subr.mxu0 0.0
    %476 = vmatpush1.msra.mxu0 %v438
    %477 = vmatprep.subr.mxu0 0.0
    %478 = vmatpush1.msra.mxu0 %v439
    %479 = vmatprep.subr.mxu0 0.0
    %480 = vmatpush1.msra.mxu0 0.0
    %481 = vmatprep.subr.mxu0 0.0
    %482 = vmatpush1.msra.mxu0 0.0
    %483 = vmatprep.subr.mxu0 0.0
    %484 = vmatpush1.msra.mxu0 0.0
    %485 = vmatprep.subr.mxu0 0.0
    %486 = vmatpush1.msra.mxu0 0.0
    %487 = vmatprep.subr.mxu0 0.0
    %488 = vmatpush1.msra.mxu0 0.0
    %489 = vmatprep.subr.mxu0 0.0
    %490 = vmatpush1.msra.mxu0 0.0
    %491 = vmatprep.subr.mxu0 0.0
    %492 = vmatpush1.msra.mxu0 0.0
    %493 = vmatprep.subr.mxu0 0.0
    %494 = vmatpush1.msra.mxu0 0.0
    %495 = vmatprep.subr.mxu0 0.0
    %496 = vmatpush1.msra.mxu0 0.0
    %497 = vmatprep.subr.mxu0 0.0
    %498 = vmatpush1.msra.mxu0 0.0
    %499 = vmatprep.subr.mxu0 0.0
    %500 = vmatpush1.msra.mxu0 0.0
    %501 = vmatprep.subr.mxu0 0.0
    %502 = vmatpush1.msra.mxu0 0.0
    %503 = vmatprep.subr.mxu0 0.0
    %504 = vmatpush1.msra.mxu0 0.0
    %505 = vmatprep.subr.mxu0 0.0
    %506 = vmatpush1.msra.mxu0 0.0
    %507 = vmatprep.subr.mxu0 0.0
    %508 = vmatpush1.msra.mxu0 0.0
    %509 = vmatprep.subr.mxu0 0.0
    %510 = vmatpush1.msra.mxu0 0.0
    %511 = vmatprep.mubr.f32.mxu0 0.0
    %512 = vmatmul.mubr.f32.gmra.mrb[0].mxu0 %v392
    %v513 = vpop.f32.mrb[0].mxu0
    %v514 = vadd.f32 %v445, %v513
    %v515 = vpop.f32.mrb[0].mxu0
    %516 = vmatprep.mubr.f32.mxu0 0.0
    %517 = vmatmul.mubr.f32.gmra.mrb[0].mxu0 %v393
    %v518 = vpop.f32.mrb[0].mxu0
    %v519 = vadd.f32 %v445, %v518
    %v520 = vpop.f32.mrb[0].mxu0
    %521 = vmatprep.mubr.f32.mxu0 0.0
    %522 = vmatmul.mubr.f32.gmra.mrb[0].mxu0 %v394
    %v523 = vpop.f32.mrb[0].mxu0
    %v524 = vadd.f32 %v445, %v523
    %v525 = vpop.f32.mrb[0].mxu0
    %526 = vmatprep.mubr.f32.mxu0 0.0
    %527 = vmatmul.mubr.f32.gmra.mrb[0].mxu0 %v395
    %v528 = vpop.f32.mrb[0].mxu0
    %v529 = vadd.f32 %v445, %v528
    %v530 = vpop.f32.mrb[0].mxu0
    %531 = vmatprep.mubr.f32.mxu0 0.0
    %532 = vmatmul.mubr.f32.gmra.mrb[0].mxu0 %v396
    %v533 = vpop.f32.mrb[0].mxu0
    %v534 = vadd.f32 %v445, %v533
    %v535 = vpop.f32.mrb[0].mxu0
    %536 = vmatprep.mubr.f32.mxu0 0.0
    %537 = vmatmul.mubr.f32.gmra.mrb[0].mxu0 %v397
    %v538 = vpop.f32.mrb[0].mxu0
    %v539 = vadd.f32 %v445, %v538
    %v540 = vpop.f32.mrb[0].mxu0
    %541 = vmatprep.mubr.f32.mxu0 0.0
    %542 = vmatmul.mubr.f32.gmra.mrb[0].mxu0 %v398
    %v543 = vpop.f32.mrb[0].mxu0
    %v544 = vadd.f32 %v445, %v543
    %v545 = vpop.f32.mrb[0].mxu0
    %546 = vmatprep.mubr.f32.mxu0 0.0
    %547 = vmatmul.mubr.f32.gmra.mrb[0].mxu0 %v399
    %v548 = vpop.f32.mrb[0].mxu0
    %v549 = vadd.f32 %v445, %v548
    %v550 = vpop.f32.mrb[0].mxu0
    %551 = vmatprep.mubr.f32.mxu0 0.0
    %552 = vmatmul.mubr.f32.gmra.mrb[0].mxu0 %v400
    %v553 = vpop.f32.mrb[0].mxu0
    %v554 = vadd.f32 %v445, %v553
    %v555 = vpop.f32.mrb[0].mxu0
    %556 = vmatprep.mubr.f32.mxu0 0.0
    %557 = vmatmul.mubr.f32.gmra.mrb[0].mxu0 %v401
    %v558 = vpop.f32.mrb[0].mxu0
    %v559 = vadd.f32 %v445, %v558
    %v560 = vpop.f32.mrb[0].mxu0
    %561 = vmatprep.mubr.f32.mxu0 0.0
    %562 = vmatmul.mubr.f32.gmra.mrb[0].mxu0 %v402
    %v563 = vpop.f32.mrb[0].mxu0
    %v564 = vadd.f32 %v445, %v563
    %v565 = vpop.f32.mrb[0].mxu0
    %566 = vmatprep.mubr.f32.mxu0 0.0
    %567 = vmatmul.mubr.f32.gmra.mrb[0].mxu0 %v403
    %v568 = vpop.f32.mrb[0].mxu0
    %v569 = vadd.f32 %v445, %v568
    %v570 = vpop.f32.mrb[0].mxu0
    %571 = vmatprep.mubr.f32.mxu0 0.0
    %572 = vmatmul.mubr.f32.gmra.mrb[0].mxu0 %v404
    %v573 = vpop.f32.mrb[0].mxu0
    %v574 = vadd.f32 %v445, %v573
    %v575 = vpop.f32.mrb[0].mxu0
    %576 = vmatprep.mubr.f32.mxu0 0.0
    %577 = vmatmul.mubr.f32.gmra.mrb[0].mxu0 %v405
    %v578 = vpop.f32.mrb[0].mxu0
    %v579 = vadd.f32 %v445, %v578
    %v580 = vpop.f32.mrb[0].mxu0
    %581 = vmatprep.mubr.f32.mxu0 0.0
    %582 = vmatmul.mubr.f32.gmra.mrb[0].mxu0 %v406
    %v583 = vpop.f32.mrb[0].mxu0
    %v584 = vadd.f32 %v445, %v583
    %v585 = vpop.f32.mrb[0].mxu0
    %586 = vmatprep.mubr.f32.mxu0 0.0
    %587 = vmatmul.mubr.f32.gmra.mrb[0].mxu0 %v407
    %v588 = vpop.f32.mrb[0].mxu0
    %v589 = vadd.f32 %v445, %v588
    %v590 = vpop.f32.mrb[0].mxu0
    %591 = vmatprep.mubr.f32.mxu0 0.0
    %592 = vmatmul.mubr.f32.gmra.mrb[0].mxu0 %v408
    %v593 = vpop.f32.mrb[0].mxu0
    %v594 = vadd.f32 %v445, %v593
    %v595 = vpop.f32.mrb[0].mxu0
    %596 = vmatprep.mubr.f32.mxu0 0.0
    %597 = vmatmul.mubr.f32.gmra.mrb[0].mxu0 %v409
    %v598 = vpop.f32.mrb[0].mxu0
    %v599 = vadd.f32 %v445, %v598
    %v600 = vpop.f32.mrb[0].mxu0
    %601 = vmatprep.mubr.f32.mxu0 0.0
    %602 = vmatmul.mubr.f32.gmra.mrb[0].mxu0 %v410
    %v603 = vpop.f32.mrb[0].mxu0
    %v604 = vadd.f32 %v445, %v603
    %v605 = vpop.f32.mrb[0].mxu0
    %606 = vmatprep.mubr.f32.mxu0 0.0
    %607 = vmatmul.mubr.f32.gmra.mrb[0].mxu0 %v411
    %v608 = vpop.f32.mrb[0].mxu0
    %v609 = vadd.f32 %v445, %v608
    %v610 = vpop.f32.mrb[0].mxu0
    %611 = vmatprep.mubr.f32.mxu0 0.0
    %612 = vmatmul.mubr.f32.gmra.mrb[0].mxu0 %v412
    %v613 = vpop.f32.mrb[0].mxu0
    %v614 = vadd.f32 %v445, %v613
    %v615 = vpop.f32.mrb[0].mxu0
    %616 = vmatprep.mubr.f32.mxu0 0.0
    %617 = vmatmul.mubr.f32.gmra.mrb[0].mxu0 %v413
    %v618 = vpop.f32.mrb[0].mxu0
    %v619 = vadd.f32 %v445, %v618
    %v620 = vpop.f32.mrb[0].mxu0
    %621 = vmatprep.mubr.f32.mxu0 0.0
    %622 = vmatmul.mubr.f32.gmra.mrb[0].mxu0 %v414
    %v623 = vpop.f32.mrb[0].mxu0
    %v624 = vadd.f32 %v445, %v623
    %v625 = vpop.f32.mrb[0].mxu0
    %626 = vmatprep.mubr.f32.mxu0 0.0
    %627 = vmatmul.mubr.f32.gmra.mrb[0].mxu0 %v415
    %v628 = vpop.f32.mrb[0].mxu0
    %v629 = vadd.f32 %v445, %v628
    %v630 = vpop.f32.mrb[0].mxu0
    %631 = vmatprep.mubr.f32.mxu0 0.0
    %632 = vmatmul.mubr.f32.gmra.mrb[0].mxu0 %v416
    %v633 = vpop.f32.mrb[0].mxu0
    %v634 = vadd.f32 %v445, %v633
    %v635 = vpop.f32.mrb[0].mxu0
    %636 = vmatprep.mubr.f32.mxu0 0.0
    %637 = vmatmul.mubr.f32.gmra.mrb[0].mxu0 %v417
    %v638 = vpop.f32.mrb[0].mxu0
    %v639 = vadd.f32 %v445, %v638
    %v640 = vpop.f32.mrb[0].mxu0
    %641 = vmatprep.mubr.f32.mxu0 0.0
    %642 = vmatmul.mubr.f32.gmra.mrb[0].mxu0 %v418
    %v643 = vpop.f32.mrb[0].mxu0
    %v644 = vadd.f32 %v445, %v643
    %v645 = vpop.f32.mrb[0].mxu0
    %646 = vmatprep.mubr.f32.mxu0 0.0
    %647 = vmatmul.mubr.f32.gmra.mrb[0].mxu0 %v419
    %v648 = vpop.f32.mrb[0].mxu0
    %v649 = vadd.f32 %v445, %v648
    %v650 = vpop.f32.mrb[0].mxu0
    %651 = vmatprep.mubr.f32.mxu0 0.0
    %652 = vmatmul.mubr.f32.gmra.mrb[0].mxu0 %v420
    %v653 = vpop.f32.mrb[0].mxu0
    %v654 = vadd.f32 %v445, %v653
    %v655 = vpop.f32.mrb[0].mxu0
    %656 = vmatprep.mubr.f32.mxu0 0.0
    %657 = vmatmul.mubr.f32.gmra.mrb[0].mxu0 %v421
    %v658 = vpop.f32.mrb[0].mxu0
    %v659 = vadd.f32 %v445, %v658
    %v660 = vpop.f32.mrb[0].mxu0
    %661 = vmatprep.mubr.f32.mxu0 0.0
    %662 = vmatmul.mubr.f32.gmra.mrb[0].mxu0 %v422
    %v663 = vpop.f32.mrb[0].mxu0
    %v664 = vadd.f32 %v445, %v663
    %v665 = vpop.f32.mrb[0].mxu0
    %666 = vmatprep.mubr.f32.mxu0 0.0
    %667 = vmatmul.mubr.f32.gmra.mrb[0].mxu0 %v423
    %v668 = vpop.f32.mrb[0].mxu0
    %v669 = vadd.f32 %v445, %v668
    %v670 = vpop.f32.mrb[0].mxu0
    %671 = vdwg.mxu0
    %v672 = vmax.f32 %v514, 1e-06
    %v673 = vmax.f32 %v519, 1e-06
    %v674 = vmax.f32 %v524, 1e-06
    %v675 = vmax.f32 %v529, 1e-06
    %v676 = vmax.f32 %v534, 1e-06
    %v677 = vmax.f32 %v539, 1e-06
    %v678 = vmax.f32 %v544, 1e-06
    %v679 = vmax.f32 %v549, 1e-06
    %v680 = vmax.f32 %v554, 1e-06
    %v681 = vmax.f32 %v559, 1e-06
    %v682 = vmax.f32 %v564, 1e-06
    %v683 = vmax.f32 %v569, 1e-06
    %v684 = vmax.f32 %v574, 1e-06
    %v685 = vmax.f32 %v579, 1e-06
    %v686 = vmax.f32 %v584, 1e-06
    %v687 = vmax.f32 %v589, 1e-06
    %v688 = vmax.f32 %v594, 1e-06
    %v689 = vmax.f32 %v599, 1e-06
    %v690 = vmax.f32 %v604, 1e-06
    %v691 = vmax.f32 %v609, 1e-06
    %v692 = vmax.f32 %v614, 1e-06
    %v693 = vmax.f32 %v619, 1e-06
    %v694 = vmax.f32 %v624, 1e-06
    %v695 = vmax.f32 %v629, 1e-06
    %v696 = vmax.f32 %v634, 1e-06
    %v697 = vmax.f32 %v639, 1e-06
    %v698 = vmax.f32 %v644, 1e-06
    %v699 = vmax.f32 %v649, 1e-06
    %v700 = vmax.f32 %v654, 1e-06
    %v701 = vmax.f32 %v659, 1e-06
    %v702 = vmax.f32 %v664, 1e-06
    %v703 = vmax.f32 %v669, 1e-06
    %v704 = vmul.f32 %v672, %v672
    %v705 = vmul.f32 %v673, %v673
    %v706 = vmul.f32 %v674, %v674
    %v707 = vmul.f32 %v675, %v675
    %v708 = vmul.f32 %v676, %v676
    %v709 = vmul.f32 %v677, %v677
    %v710 = vmul.f32 %v678, %v678
    %v711 = vmul.f32 %v679, %v679
    %v712 = vmul.f32 %v680, %v680
    %v713 = vmul.f32 %v681, %v681
    %v714 = vmul.f32 %v682, %v682
    %v715 = vmul.f32 %v683, %v683
    %v716 = vmul.f32 %v684, %v684
    %v717 = vmul.f32 %v685, %v685
    %v718 = vmul.f32 %v686, %v686
    %v719 = vmul.f32 %v687, %v687
    %v720 = vmul.f32 %v688, %v688
    %v721 = vmul.f32 %v689, %v689
    %v722 = vmul.f32 %v690, %v690
    %v723 = vmul.f32 %v691, %v691
    %v724 = vmul.f32 %v692, %v692
    %v725 = vmul.f32 %v693, %v693
    %v726 = vmul.f32 %v694, %v694
    %v727 = vmul.f32 %v695, %v695
    %v728 = vmul.f32 %v696, %v696
    %v729 = vmul.f32 %v697, %v697
    %v730 = vmul.f32 %v698, %v698
    %v731 = vmul.f32 %v699, %v699
    %v732 = vmul.f32 %v700, %v700
    %v733 = vmul.f32 %v701, %v701
    %v734 = vmul.f32 %v702, %v702
    %v735 = vmul.f32 %v703, %v703
    %v736 = vmul.f32 %v704, %v672
    %v737 = vmul.f32 %v705, %v673
    %v738 = vmul.f32 %v706, %v674
    %v739 = vmul.f32 %v707, %v675
    %v740 = vmul.f32 %v708, %v676
    %v741 = vmul.f32 %v709, %v677
    %v742 = vmul.f32 %v710, %v678
    %v743 = vmul.f32 %v711, %v679
    %v744 = vmul.f32 %v712, %v680
    %v745 = vmul.f32 %v713, %v681
    %v746 = vmul.f32 %v714, %v682
    %v747 = vmul.f32 %v715, %v683
    %v748 = vmul.f32 %v716, %v684
    %v749 = vmul.f32 %v717, %v685
    %v750 = vmul.f32 %v718, %v686
    %v751 = vmul.f32 %v719, %v687
    %v752 = vmul.f32 %v720, %v688
    %v753 = vmul.f32 %v721, %v689
    %v754 = vmul.f32 %v722, %v690
    %v755 = vmul.f32 %v723, %v691
    %v756 = vmul.f32 %v724, %v692
    %v757 = vmul.f32 %v725, %v693
    %v758 = vmul.f32 %v726, %v694
    %v759 = vmul.f32 %v727, %v695
    %v760 = vmul.f32 %v728, %v696
    %v761 = vmul.f32 %v729, %v697
    %v762 = vmul.f32 %v730, %v698
    %v763 = vmul.f32 %v731, %v699
    %v764 = vmul.f32 %v732, %v700
    %v765 = vmul.f32 %v733, %v701
    %v766 = vmul.f32 %v734, %v702
    %v767 = vmul.f32 %v735, %v703
    %v768 = vld [vmem:[#allocation2] sm:$0x3]
    %v769 = vadd.f32 %v736, %v737
    %v770 = vadd.f32 %v769, %v738
    %v771 = vadd.f32 %v770, %v739
    %v772 = vadd.f32 %v771, %v740
    %v773 = vadd.f32 %v772, %v741
    %v774 = vadd.f32 %v773, %v742
    %v775 = vadd.f32 %v774, %v743
    %v776 = vadd.f32 %v775, %v744
    %v777 = vadd.f32 %v776, %v745
    %v778 = vadd.f32 %v777, %v746
    %v779 = vadd.f32 %v778, %v747
    %v780 = vadd.f32 %v779, %v748
    %v781 = vadd.f32 %v780, %v749
    %v782 = vadd.f32 %v781, %v750
    %v783 = vadd.f32 %v782, %v751
    %v784 = vrot.slane %v783, 4
    %v785 = vadd.f32 %v783, %v784
    %v786 = vrot.slane %v785, 2
    %v787 = vadd.f32 %v785, %v786
    %v788 = vrot.slane %v787, 1
    %v789 = vadd.f32 %v787, %v788
    %v790 = vadd.f32 %v752, %v753
    %v791 = vadd.f32 %v790, %v754
    %v792 = vadd.f32 %v791, %v755
    %v793 = vadd.f32 %v792, %v756
    %v794 = vadd.f32 %v793, %v757
    %v795 = vadd.f32 %v794, %v758
    %v796 = vadd.f32 %v795, %v759
    %v797 = vadd.f32 %v796, %v760
    %v798 = vadd.f32 %v797, %v761
    %v799 = vadd.f32 %v798, %v762
    %v800 = vadd.f32 %v799, %v763
    %v801 = vadd.f32 %v800, %v764
    %v802 = vadd.f32 %v801, %v765
    %v803 = vadd.f32 %v802, %v766
    %v804 = vadd.f32 %v803, %v767
    %v805 = vrot.slane %v804, 4
    %v806 = vadd.f32 %v804, %v805
    %v807 = vrot.slane %v806, 2
    %v808 = vadd.f32 %v806, %v807
    %v809 = vrot.slane %v808, 1
    %v810 = vadd.f32 %v808, %v809
    %vm813 = vcmask 1041409
    %v814 = vsel %vm813, %v810, %v789
    %v816 = vadd.f32 %v768, %v814
    %817 = vst [vmem:[#allocation2] sm:$0x3] %v816
    // Predicated region
    $region26: #{tpu_custom_call.1} parent=1 // pred_check
      %p818 = pneg %p21
    $region27: #{tpu_custom_call.1} parent=1 // pred_check_branch
      %820 = sbr.rel (%p818) target = $region29
    $region28: #{tpu_custom_call.1} parent=1 // pred_region
      %v821 = vld [vmem:[#allocation2] sm:$0x3]
      %v822 = vmul.f32 %v821, 0.0078125
      %v823 = vpow.f32 %v822, 0.33333334
      %v824 = vlaneseq
      %v825 = vand.u32 %v824, 127
      %vm826 = vcmp.lt.s32.totalorder %v825, 64
      %v827 = vsel %vm826, %v823, 0.0
      %v828 = vmul.f32 %v827, %v827
      %vm829 = vcmask 1041408
      %v830 = vsel %vm829, %v828, 0.0
      %831 = vadd.xlane.f32.xlu0 %v830
      %v832 = vpop.xlane.xlu0 %831
      %v833 = vadd.f32 %v832, 1e-12
      %v834 = vrsqrt.pop %v833
      %v835 = vmul.f32 %v827, %v834
      %836 = vst [vmem:[#allocation3] sm:$0x3] %v835
    $region29: #{tpu_custom_call.1} parent=1 // pred_fallthru
      _
    // Predicated region
    $region30: #{tpu_custom_call.1} parent=1 // pred_check
      _
    $region31: #{tpu_custom_call.1} parent=1 // pred_check_branch
      %838 = sbr.rel (0) target = $region33
    $region32: #{tpu_custom_call.1} parent=1 // pred_region
      %s840 = ssub.s32 32, 32
      %841 = vsyncadd [#allocation4], %s840
      %s843 = sshll.u32 [#allocation3], 4
      %s844 = int_to_ptr.vmem [resolvable:$true] %s843
      %846 = dma.vmem_to_hbm [thread:$0]  %s844, 32, %s5, [#allocation4]
    $region33: #{tpu_custom_call.1} parent=1 // pred_fallthru
      _
    // Predicated region
    $region34: #{tpu_custom_call.1} parent=1 // pred_check
      _
    $region35: #{tpu_custom_call.1} parent=1 // pred_check_branch
      %848 = sbr.rel (0) target = $region37
    $region36: #{tpu_custom_call.1} parent=1 // pred_region
      %849 = dma.done [#allocation4], 32
    $region37: #{tpu_custom_call.1} parent=1 // pred_fallthru
      _
    %850 = vsyncpa [#allocation4], 1

</llo_original>
